<compile_context>
chip_gen: v7x
topology: tpu7x:2x2x1
jax: 0.10.0
libtpu: 0.0.40
codegen_flags: <defaults>
</compile_context>

<pallas_src>
import functools

import jax
import jax.numpy as jnp
from jax.experimental import pallas as pl
from jax.experimental.pallas import tpu as pltpu


# --------------------------------------------------------------------------
# Fused kernel: depthwise 3x3 (+BN1) + ReLU + 1x1 conv (+BN2) + ReLU
# --------------------------------------------------------------------------
def _fused_dsconv_kernel(x_ref, tm_ref, b_ref, w_ref, o_ref, *,
                         H, W, nb_cin, nb_cout):
    """One block of nb images (stacked on sublanes) per program.

    x_ref  : (1, nb_cin, HW)      input, channels-of-nb-images x flat spatial
    tm_ref : (9, nb_cin, HW)      premultiplied (tap * BN1scale * boundary mask)
    b_ref  : (nb_cin+nb_cout, 1)  [BN1 bias ; BN2 bias], per stacked channel
    w_ref  : (nb_cout, nb_cin)    block-diagonal 1x1 weight (BN2 scale folded)
    o_ref  : (1, nb_cout, HW)     output, lane-dense last dim
    """
    HW = H * W
    x = x_ref[0].astype(jnp.float32)                       # (nb_cin, HW)

    # Depthwise 3x3 with padding=1: nine lane-rotations, each multiplied by a
    # host-precomputed (tap * scale * mask) slab -> 1 mul + 1 add per tap.
    acc = None
    k = 0
    for dy in (-1, 0, 1):
        for dx in (-1, 0, 1):
            s = dy * W + dx                                # flat source offset
            shifted = x if s == 0 else pltpu.roll(x, shift=(-s) % HW, axis=1)
            term = shifted * tm_ref[k]
            acc = term if acc is None else acc + term
            k += 1

    bias = b_ref[...].astype(jnp.float32)                  # (nb_cin+nb_cout, 1)
    b1 = bias[0:nb_cin]
    b2 = bias[nb_cin:nb_cin + nb_cout]

    # BN1 bias + ReLU (scale already folded into taps; Dropout = identity).
    h = jnp.maximum(acc + b1, 0.0)                         # (nb_cin, HW)

    # Pointwise 1x1 conv for all stacked images as one MXU matmul (block-diag
    # weight, BN2 scale folded), then BN2 bias + ReLU.
    y = jnp.dot(w_ref[...].astype(jnp.float32), h,
                preferred_element_type=jnp.float32)        # (nb_cout, HW)
    y = jnp.maximum(y + b2, 0.0)
    o_ref[0] = y.astype(o_ref.dtype)


def depthwise_separable_conv2d(x, params):
    """x: (N, Cin, H, W) NCHW -> (N, Cout, H, W) NCHW (eval-mode forward)."""
    N, Cin, H, W = x.shape
    Cout = params["w_pw"].shape[0]
    HW = H * W
    dtype = x.dtype

    # --- host-side weight preprocessing (zero runtime cost) -----------------
    s1, b1 = params["bn1_scale"], params["bn1_bias"]
    s2, b2 = params["bn2_scale"], params["bn2_bias"]
    w9 = params["w_dw"].reshape(Cin, 9) * s1[:, None]      # BN1 scale folded
    wp = params["w_pw"] * s2[:, None]                      # BN2 scale folded

    # Stack nb images on the sublane axis so nb*Cin fills the 8 f32 sublanes
    # and per-grid-step overhead is amortized.
    nb = max(1, 8 // Cin) if Cin < 8 else 1
    while N % nb:
        nb -= 1
    G = N // nb

    # Static zero-padding boundary masks for the 9 taps (function of H, W only).
    hh = jnp.arange(HW, dtype=jnp.int32) // W
    ww = jnp.arange(HW, dtype=jnp.int32) % W
    masks = []
    for dy in (-1, 0, 1):
        for dx in (-1, 0, 1):
            m = ((hh + dy >= 0) & (hh + dy < H) &
                 (ww + dx >= 0) & (ww + dx < W))
            masks.append(m.astype(jnp.float32))
    masks = jnp.stack(masks)                               # (9, HW)

    # Premultiplied (tap * BN1scale * mask) slabs tiled over the nb stacked
    # images: (9, nb*Cin, HW). Fine at these sizes; for large C/HW pass masks
    # (9,HW) and taps (9,C,1) separately instead.
    w9s = jnp.tile(w9, (nb, 1))                            # (nb*Cin, 9)
    tm = (w9s.T[:, :, None] * masks[:, None, :]).astype(jnp.float32)

    # Block-diagonal pointwise weight -> one matmul covers all nb images.
    wblk = jnp.kron(jnp.eye(nb, dtype=jnp.float32), wp.astype(jnp.float32))

    # Merged per-channel biases: [BN1 bias (stacked) ; BN2 bias (stacked)].
    bias_all = jnp.concatenate(
        [jnp.tile(b1, nb), jnp.tile(b2, nb)]).astype(jnp.float32)[:, None]

    x3 = x.reshape(G, nb * Cin, HW)                        # contiguous view

    out = pl.pallas_call(
        functools.partial(_fused_dsconv_kernel, H=H, W=W,
                          nb_cin=nb * Cin, nb_cout=nb * Cout),
        out_shape=jax.ShapeDtypeStruct((G, nb * Cout, HW), dtype),
        grid=(G,),
        in_specs=[
            pl.BlockSpec((1, nb * Cin, HW), lambda g: (g, 0, 0)),
            pl.BlockSpec((9, nb * Cin, HW), lambda g: (0, 0, 0)),
            pl.BlockSpec((nb * (Cin + Cout), 1), lambda g: (0, 0)),
            pl.BlockSpec((nb * Cout, nb * Cin), lambda g: (0, 0)),
        ],
        out_specs=pl.BlockSpec((1, nb * Cout, HW), lambda g: (g, 0, 0)),
        compiler_params=pltpu.CompilerParams(
            dimension_semantics=("parallel",)),
    )(x3, tm, bias_all, wblk)

    return out.reshape(N, Cout, H, W)                      # contiguous view


# --------------------------------------------------------------------------
# Params (BN folded to inference-mode scale/bias) and pure-JAX reference
# --------------------------------------------------------------------------
def init_params(key, in_channels, out_channels, dtype=jnp.float32):
    k1, k2 = jax.random.split(key, 2)
    eps = 1e-5
    # conv1 weight: PyTorch shape (C, 1, 3, 3) -> stored as (C, 3, 3)
    w_dw = jax.random.normal(k1, (in_channels, 3, 3), dtype) * 0.1
    # conv2 weight: PyTorch shape (Cout, Cin, 1, 1) -> stored as (Cout, Cin)
    w_pw = jax.random.normal(k2, (out_channels, in_channels), dtype) * 0.1

    g1 = 1.0 + 0.05 * jnp.arange(in_channels, dtype=dtype)
    b1 = 0.02 * jnp.arange(in_channels, dtype=dtype)
    m1 = jnp.zeros((in_channels,), dtype)
    v1 = jnp.ones((in_channels,), dtype)
    s1 = g1 * jax.lax.rsqrt(v1 + eps)
    bn1_bias = b1 - m1 * s1

    g2 = 1.0 + 0.03 * jnp.arange(out_channels, dtype=dtype)
    b2 = -0.01 * jnp.arange(out_channels, dtype=dtype)
    m2 = jnp.zeros((out_channels,), dtype)
    v2 = jnp.ones((out_channels,), dtype)
    s2 = g2 * jax.lax.rsqrt(v2 + eps)
    bn2_bias = b2 - m2 * s2

    return {"w_dw": w_dw, "w_pw": w_pw,
            "bn1_scale": s1, "bn1_bias": bn1_bias,
            "bn2_scale": s2, "bn2_bias": bn2_bias}


def reference_forward(x, params):
    """Pure-JAX reference for correctness checking."""
    C = x.shape[1]
    w = params["w_dw"].reshape(C, 1, 3, 3)                 # OIHW, groups=C
    h = jax.lax.conv_general_dilated(
        x, w, window_strides=(1, 1), padding=((1, 1), (1, 1)),
        dimension_numbers=("NCHW", "OIHW", "NCHW"),
        feature_group_count=C)
    h = h * params["bn1_scale"][None, :, None, None] + params["bn1_bias"][None, :, None, None]
    h = jnp.maximum(h, 0.0)
    y = jnp.einsum("nchw,oc->nohw", h, params["w_pw"])
    y = y * params["bn2_scale"][None, :, None, None] + params["bn2_bias"][None, :, None, None]
    return jnp.maximum(y, 0.0)


if __name__ == "__main__":
    key = jax.random.PRNGKey(0)
    kx, kp = jax.random.split(key)

    N, Cin, Cout, H, W = 2, 4, 8, 16, 16
    x = jax.random.normal(kx, (N, Cin, H, W), jnp.float32)
    params = init_params(kp, Cin, Cout)

    out = depthwise_separable_conv2d(x, params)
    out = jax.block_until_ready(out)

    ref = reference_forward(x, params)
    assert out.shape == (N, Cout, H, W), out.shape
    assert jnp.allclose(out, ref, rtol=1e-4, atol=1e-4), "mismatch vs reference"

    print("KERNEL_OK")
</pallas_src>

<mosaic_0001>
module attributes {stable_mosaic.version = 11 : i64} {
  func.func @_fused_dsconv_kernel(%arg0: i32, %arg1: memref<1x8x256xf32, #tpu.memory_space<vmem>>, %arg2: memref<9x8x256xf32, #tpu.memory_space<vmem>>, %arg3: memref<24x1xf32, #tpu.memory_space<vmem>>, %arg4: memref<16x8xf32, #tpu.memory_space<vmem>>, %arg5: memref<1x16x256xf32, #tpu.memory_space<vmem>>) attributes {dimension_semantics = [#tpu.dimension_semantics<parallel>], iteration_bounds = array<i64: 1>, scalar_prefetch = 0 : i64, scratch_operands = 0 : i64, tpu.core_type = #tpu.core_type<tc>, window_params = [{transform_indices = @transform_0, window_bounds = array<i64: 1, 8, 256>}, {pipeline_mode = #tpu.pipeline_mode<synchronous>, transform_indices = @transform_1, window_bounds = array<i64: 9, 8, 256>}, {pipeline_mode = #tpu.pipeline_mode<synchronous>, transform_indices = @transform_2, window_bounds = array<i64: 24, 1>}, {pipeline_mode = #tpu.pipeline_mode<synchronous>, transform_indices = @transform_3, window_bounds = array<i64: 16, 8>}, {transform_indices = @transform_4, window_bounds = array<i64: 1, 16, 256>}]} {
    %c0 = arith.constant 0 : index
    %c0_0 = arith.constant 0 : index
    %c0_1 = arith.constant 0 : index
    %0 = vector.load %arg1[%c0, %c0_0, %c0_1] : memref<1x8x256xf32, #tpu.memory_space<vmem>>, vector<1x8x256xf32>
    %1 = vector.shape_cast %0 : vector<1x8x256xf32> to vector<8x256xf32>
    %c17_i32 = arith.constant 17 : i32
    %2 = tpu.dynamic_rotate %1 by %c17_i32 dim 1 : vector<8x256xf32>, i32 -> vector<8x256xf32>
    %c0_2 = arith.constant 0 : index
    %c0_3 = arith.constant 0 : index
    %c0_4 = arith.constant 0 : index
    %3 = vector.load %arg2[%c0_2, %c0_3, %c0_4] : memref<9x8x256xf32, #tpu.memory_space<vmem>>, vector<1x8x256xf32>
    %4 = vector.shape_cast %3 : vector<1x8x256xf32> to vector<8x256xf32>
    %5 = arith.mulf %2, %4 : vector<8x256xf32>
    %c16_i32 = arith.constant 16 : i32
    %6 = tpu.dynamic_rotate %1 by %c16_i32 dim 1 : vector<8x256xf32>, i32 -> vector<8x256xf32>
    %c1 = arith.constant 1 : index
    %c0_5 = arith.constant 0 : index
    %c0_6 = arith.constant 0 : index
    %7 = vector.load %arg2[%c1, %c0_5, %c0_6] : memref<9x8x256xf32, #tpu.memory_space<vmem>>, vector<1x8x256xf32>
    %8 = vector.shape_cast %7 : vector<1x8x256xf32> to vector<8x256xf32>
    %9 = arith.mulf %6, %8 : vector<8x256xf32>
    %10 = arith.addf %5, %9 : vector<8x256xf32>
    %c15_i32 = arith.constant 15 : i32
    %11 = tpu.dynamic_rotate %1 by %c15_i32 dim 1 : vector<8x256xf32>, i32 -> vector<8x256xf32>
    %c2 = arith.constant 2 : index
    %c0_7 = arith.constant 0 : index
    %c0_8 = arith.constant 0 : index
    %12 = vector.load %arg2[%c2, %c0_7, %c0_8] : memref<9x8x256xf32, #tpu.memory_space<vmem>>, vector<1x8x256xf32>
    %13 = vector.shape_cast %12 : vector<1x8x256xf32> to vector<8x256xf32>
    %14 = arith.mulf %11, %13 : vector<8x256xf32>
    %15 = arith.addf %10, %14 : vector<8x256xf32>
    %c1_i32 = arith.constant 1 : i32
    %16 = tpu.dynamic_rotate %1 by %c1_i32 dim 1 : vector<8x256xf32>, i32 -> vector<8x256xf32>
    %c3 = arith.constant 3 : index
    %c0_9 = arith.constant 0 : index
    %c0_10 = arith.constant 0 : index
    %17 = vector.load %arg2[%c3, %c0_9, %c0_10] : memref<9x8x256xf32, #tpu.memory_space<vmem>>, vector<1x8x256xf32>
    %18 = vector.shape_cast %17 : vector<1x8x256xf32> to vector<8x256xf32>
    %19 = arith.mulf %16, %18 : vector<8x256xf32>
    %20 = arith.addf %15, %19 : vector<8x256xf32>
    %c4 = arith.constant 4 : index
    %c0_11 = arith.constant 0 : index
    %c0_12 = arith.constant 0 : index
    %21 = vector.load %arg2[%c4, %c0_11, %c0_12] : memref<9x8x256xf32, #tpu.memory_space<vmem>>, vector<1x8x256xf32>
    %22 = vector.shape_cast %21 : vector<1x8x256xf32> to vector<8x256xf32>
    %23 = arith.mulf %1, %22 : vector<8x256xf32>
    %24 = arith.addf %20, %23 : vector<8x256xf32>
    %c255_i32 = arith.constant 255 : i32
    %25 = tpu.dynamic_rotate %1 by %c255_i32 dim 1 : vector<8x256xf32>, i32 -> vector<8x256xf32>
    %c5 = arith.constant 5 : index
    %c0_13 = arith.constant 0 : index
    %c0_14 = arith.constant 0 : index
    %26 = vector.load %arg2[%c5, %c0_13, %c0_14] : memref<9x8x256xf32, #tpu.memory_space<vmem>>, vector<1x8x256xf32>
    %27 = vector.shape_cast %26 : vector<1x8x256xf32> to vector<8x256xf32>
    %28 = arith.mulf %25, %27 : vector<8x256xf32>
    %29 = arith.addf %24, %28 : vector<8x256xf32>
    %c241_i32 = arith.constant 241 : i32
    %30 = tpu.dynamic_rotate %1 by %c241_i32 dim 1 : vector<8x256xf32>, i32 -> vector<8x256xf32>
    %c6 = arith.constant 6 : index
    %c0_15 = arith.constant 0 : index
    %c0_16 = arith.constant 0 : index
    %31 = vector.load %arg2[%c6, %c0_15, %c0_16] : memref<9x8x256xf32, #tpu.memory_space<vmem>>, vector<1x8x256xf32>
    %32 = vector.shape_cast %31 : vector<1x8x256xf32> to vector<8x256xf32>
    %33 = arith.mulf %30, %32 : vector<8x256xf32>
    %34 = arith.addf %29, %33 : vector<8x256xf32>
    %c240_i32 = arith.constant 240 : i32
    %35 = tpu.dynamic_rotate %1 by %c240_i32 dim 1 : vector<8x256xf32>, i32 -> vector<8x256xf32>
    %c7 = arith.constant 7 : index
    %c0_17 = arith.constant 0 : index
    %c0_18 = arith.constant 0 : index
    %36 = vector.load %arg2[%c7, %c0_17, %c0_18] : memref<9x8x256xf32, #tpu.memory_space<vmem>>, vector<1x8x256xf32>
    %37 = vector.shape_cast %36 : vector<1x8x256xf32> to vector<8x256xf32>
    %38 = arith.mulf %35, %37 : vector<8x256xf32>
    %39 = arith.addf %34, %38 : vector<8x256xf32>
    %c239_i32 = arith.constant 239 : i32
    %40 = tpu.dynamic_rotate %1 by %c239_i32 dim 1 : vector<8x256xf32>, i32 -> vector<8x256xf32>
    %c8 = arith.constant 8 : index
    %c0_19 = arith.constant 0 : index
    %c0_20 = arith.constant 0 : index
    %41 = vector.load %arg2[%c8, %c0_19, %c0_20] : memref<9x8x256xf32, #tpu.memory_space<vmem>>, vector<1x8x256xf32>
    %42 = vector.shape_cast %41 : vector<1x8x256xf32> to vector<8x256xf32>
    %43 = arith.mulf %40, %42 : vector<8x256xf32>
    %44 = arith.addf %39, %43 : vector<8x256xf32>
    %c0_21 = arith.constant 0 : index
    %c0_22 = arith.constant 0 : index
    %45 = vector.load %arg3[%c0_21, %c0_22] : memref<24x1xf32, #tpu.memory_space<vmem>>, vector<24x1xf32>
    %46 = vector.extract_strided_slice %45 {offsets = [0, 0], sizes = [8, 1], strides = [1, 1]} : vector<24x1xf32> to vector<8x1xf32>
    %47 = vector.extract_strided_slice %45 {offsets = [8, 0], sizes = [16, 1], strides = [1, 1]} : vector<24x1xf32> to vector<16x1xf32>
    %48 = vector.broadcast %46 : vector<8x1xf32> to vector<8x256xf32>
    %49 = arith.addf %44, %48 : vector<8x256xf32>
    %cst = arith.constant 0.000000e+00 : f32
    %50 = vector.broadcast %cst : f32 to vector<8x256xf32>
    %51 = arith.maximumf %49, %50 : vector<8x256xf32>
    %c0_23 = arith.constant 0 : index
    %c0_24 = arith.constant 0 : index
    %52 = vector.load %arg4[%c0_23, %c0_24] : memref<16x8xf32, #tpu.memory_space<vmem>>, vector<16x8xf32>
    %cst_25 = arith.constant dense<0.000000e+00> : vector<16x256xf32>
    %53 = tpu.matmul %52, %51, %cst_25 {dimension_numbers = #tpu.dot_dimension_numbers<[1], [0], [0], [1], [0, 0, 1, 1], [], []>} : vector<16x8xf32>, vector<8x256xf32>, vector<16x256xf32> -> vector<16x256xf32>
    %54 = vector.broadcast %47 : vector<16x1xf32> to vector<16x256xf32>
    %55 = arith.addf %53, %54 : vector<16x256xf32>
    %cst_26 = arith.constant 0.000000e+00 : f32
    %56 = vector.broadcast %cst_26 : f32 to vector<16x256xf32>
    %57 = arith.maximumf %55, %56 : vector<16x256xf32>
    %c0_27 = arith.constant 0 : index
    %c0_28 = arith.constant 0 : index
    %c0_29 = arith.constant 0 : index
    %58 = vector.load %arg5[%c0_27, %c0_28, %c0_29] : memref<1x16x256xf32, #tpu.memory_space<vmem>>, vector<1x16x256xf32>
    %59 = vector.shape_cast %58 : vector<1x16x256xf32> to vector<16x256xf32>
    %60 = vector.shape_cast %57 : vector<16x256xf32> to vector<1x16x256xf32>
    tpu.vector_store %arg5[%c0_27, %c0_28, %c0_29], %60 {strides = array<i32>} : memref<1x16x256xf32, #tpu.memory_space<vmem>>, vector<1x16x256xf32>,
    return
  }
  func.func @transform_0(%arg0: i32) -> (i32, i32, i32) {
    %c0_i32 = arith.constant 0 : i32
    %c0_i32_0 = arith.constant 0 : i32
    %c0_i32_1 = arith.constant 0 : i32
    return %arg0, %c0_i32, %c0_i32_0 : i32, i32, i32
  }
  func.func @transform_1(%arg0: i32) -> (i32, i32, i32) {
    %c0_i32 = arith.constant 0 : i32
    %c0_i32_0 = arith.constant 0 : i32
    %c0_i32_1 = arith.constant 0 : i32
    %c0_i32_2 = arith.constant 0 : i32
    return %c0_i32, %c0_i32_0, %c0_i32_1 : i32, i32, i32
  }
  func.func @transform_2(%arg0: i32) -> (i32, i32) {
    %c0_i32 = arith.constant 0 : i32
    %c0_i32_0 = arith.constant 0 : i32
    %c0_i32_1 = arith.constant 0 : i32
    return %c0_i32, %c0_i32_0 : i32, i32
  }
  func.func @transform_3(%arg0: i32) -> (i32, i32) {
    %c0_i32 = arith.constant 0 : i32
    %c0_i32_0 = arith.constant 0 : i32
    %c0_i32_1 = arith.constant 0 : i32
    return %c0_i32, %c0_i32_0 : i32, i32
  }
  func.func @transform_4(%arg0: i32) -> (i32, i32, i32) {
    %c0_i32 = arith.constant 0 : i32
    %c0_i32_0 = arith.constant 0 : i32
    %c0_i32_1 = arith.constant 0 : i32
    return %arg0, %c0_i32, %c0_i32_0 : i32, i32, i32
  }
}

</mosaic_0001>

<llo_original>
// kernel: tpu_custom_call.1
$region0: #{tpu_custom_call.1}
  #allocation0 [shape = 'u32[]', space=smem, size = 0x4, offset = 0x4, fixed_abs, tag = 'smem constant byte address 0x4 - core index']
  #allocation1 [shape = 'u32[144,128]{1,0:T(1,128)}', space=vmem, size = 0x12000, scoped, tag = 'internal scratch']
  %s0 = inlined_call_operand.vmem [shape: f32[1,8,256], index: 0, kind: input, shape index: {}]
  %s1 = inlined_call_operand.hbm [shape: f32[9,8,256], index: 1, kind: input, shape index: {}]
  %s2 = inlined_call_operand.vmem [shape: f32[24,1], index: 2, kind: input, shape index: {}]
  %s3 = inlined_call_operand.vmem [shape: f32[16,8], index: 3, kind: input, shape index: {}]
  %s4 = inlined_call_operand.hbm [shape: f32[1,16,256], index: 4, kind: output, shape index: {}]
  %s5 = sld [smem:[#allocation0]]
  $region30: #{tpu_custom_call.1} parent=0
    _
  %s7 = ssub.s32 1, %s5
  %s8 = scalar_select 0, %s7, %s5
  $region1: #{tpu_custom_call.1} parent=0
    #allocation2 [shape = 'u8[73728]{0}', space=vmem, size = 0x12000, scoped, tag = 'input window, operand 1, single buffered']
    #allocation3 [shape = 's32[1]{0}', space=sflag, size = 0x4, scoped, tag = 'scoped memory for tpu_custom_call.1']
    #allocation4 [shape = 's32[1]{0}', space=sflag, size = 0x4, scoped, tag = 'scoped memory for tpu_custom_call.1']
    #allocation5 [shape = 'u8[16384]{0}', space=vmem, size = 0x4000, scoped, tag = 'output window, operand 0, single buffered']
    %9 = vsyncpa [#allocation3], 0
    %10 = vsyncpa [#allocation4], 0
    // Predicated region
    $region2: #{tpu_custom_call.1} parent=1 // pred_check
      _
    $region3: #{tpu_custom_call.1} parent=1 // pred_check_branch
      %12 = sbr.rel (0) target = $region5
    $region4: #{tpu_custom_call.1} parent=1 // pred_region
      _
    $region5: #{tpu_custom_call.1} parent=1 // pred_fallthru
      _
    // Predicated region
    $region6: #{tpu_custom_call.1} parent=1 // pred_check
      _
    $region7: #{tpu_custom_call.1} parent=1 // pred_check_branch
      %14 = sbr.rel (0) target = $region9
    $region8: #{tpu_custom_call.1} parent=1 // pred_region
      %s16 = ssub.s32 2304, 2304
      %17 = vsyncadd [#allocation3], %s16
      %s18 = sshll.u32 [#allocation2], 4
      %s19 = int_to_ptr.vmem [resolvable:$true] %s18
      %24 = dma.hbm_to_vmem [thread:$0]  %s1, 2304, %s19, [#allocation3], 256, 256, 16
    $region9: #{tpu_custom_call.1} parent=1 // pred_fallthru
      _
    // Predicated region
    $region10: #{tpu_custom_call.1} parent=1 // pred_check
      _
    $region11: #{tpu_custom_call.1} parent=1 // pred_check_branch
      %26 = sbr.rel (0) target = $region13
    $region12: #{tpu_custom_call.1} parent=1 // pred_region
      _
    $region13: #{tpu_custom_call.1} parent=1 // pred_fallthru
      _
    // Predicated region
    $region14: #{tpu_custom_call.1} parent=1 // pred_check
      _
    $region15: #{tpu_custom_call.1} parent=1 // pred_check_branch
      %28 = sbr.rel (0) target = $region17
    $region16: #{tpu_custom_call.1} parent=1 // pred_region
      _
    $region17: #{tpu_custom_call.1} parent=1 // pred_fallthru
      _
    // Predicated region
    $region18: #{tpu_custom_call.1} parent=1 // pred_check
      _
    $region19: #{tpu_custom_call.1} parent=1 // pred_check_branch
      %30 = sbr.rel (0) target = $region21
    $region20: #{tpu_custom_call.1} parent=1 // pred_region
      %31 = dma.done [#allocation3], 2304
    $region21: #{tpu_custom_call.1} parent=1 // pred_fallthru
      _
    %v32 = vld [vmem:[%s0] sm:$0xff]
    %v33 = vld [vmem:[%s0 + $0x8] sm:$0xff]
    %34 = vrot.lane.b32.xlu0 %v32, 17
    %v35 = vpop.permute.xlu0 %34
    %36 = vrot.lane.b32.xlu0 %v33, 17
    %v37 = vpop.permute.xlu0 %36
    %v38 = vlaneseq
    %v39 = vand.u32 %v38, 127
    %vm40 = vcmp.lt.s32.totalorder %v39, 17
    %v41 = vsel %vm40, %v35, %v37
    %v42 = vsel %vm40, %v37, %v35
    %v43 = vld [vmem:[#allocation2] sm:$0xff]
    %v44 = vld [vmem:[#allocation2 + $0x8] sm:$0xff]
    %v45 = vmul.f32 %v42, %v43
    %v46 = vmul.f32 %v41, %v44
    %47 = vrot.lane.b32.xlu0 %v32, 16
    %v48 = vpop.permute.xlu0 %47
    %49 = vrot.lane.b32.xlu0 %v33, 16
    %v50 = vpop.permute.xlu0 %49
    %vm51 = vcmp.lt.s32.totalorder %v39, 16
    %v52 = vsel %vm51, %v48, %v50
    %v53 = vsel %vm51, %v50, %v48
    %s54 = scalar_lea.vmem [#allocation2], 16
    %v55 = vld [vmem:[%s54] sm:$0xff]
    %v56 = vld [vmem:[%s54 + $0x8] sm:$0xff]
    %v57 = vmul.f32 %v53, %v55
    %v58 = vmul.f32 %v52, %v56
    %v59 = vadd.f32 %v45, %v57
    %v60 = vadd.f32 %v46, %v58
    %61 = vrot.lane.b32.xlu0 %v32, 15
    %v62 = vpop.permute.xlu0 %61
    %63 = vrot.lane.b32.xlu0 %v33, 15
    %v64 = vpop.permute.xlu0 %63
    %vm65 = vcmp.lt.s32.totalorder %v39, 15
    %v66 = vsel %vm65, %v62, %v64
    %v67 = vsel %vm65, %v64, %v62
    %s68 = scalar_lea.vmem [#allocation2], 32
    %v69 = vld [vmem:[%s68] sm:$0xff]
    %v70 = vld [vmem:[%s68 + $0x8] sm:$0xff]
    %v71 = vmul.f32 %v67, %v69
    %v72 = vmul.f32 %v66, %v70
    %v73 = vadd.f32 %v59, %v71
    %v74 = vadd.f32 %v60, %v72
    %75 = vrot.lane.b32.xlu0 %v32, 1
    %v76 = vpop.permute.xlu0 %75
    %77 = vrot.lane.b32.xlu0 %v33, 1
    %v78 = vpop.permute.xlu0 %77
    %vm79 = vcmp.lt.s32.totalorder %v39, 1
    %v80 = vsel %vm79, %v76, %v78
    %v81 = vsel %vm79, %v78, %v76
    %s82 = scalar_lea.vmem [#allocation2], 48
    %v83 = vld [vmem:[%s82] sm:$0xff]
    %v84 = vld [vmem:[%s82 + $0x8] sm:$0xff]
    %v85 = vmul.f32 %v81, %v83
    %v86 = vmul.f32 %v80, %v84
    %v87 = vadd.f32 %v73, %v85
    %v88 = vadd.f32 %v74, %v86
    %s89 = scalar_lea.vmem [#allocation2], 64
    %v90 = vld [vmem:[%s89] sm:$0xff]
    %v91 = vld [vmem:[%s89 + $0x8] sm:$0xff]
    %v92 = vmul.f32 %v32, %v90
    %v93 = vmul.f32 %v33, %v91
    %v94 = vadd.f32 %v87, %v92
    %v95 = vadd.f32 %v88, %v93
    %96 = vrot.lane.b32.xlu0 %v32, 127
    %v97 = vpop.permute.xlu0 %96
    %98 = vrot.lane.b32.xlu0 %v33, 127
    %v99 = vpop.permute.xlu0 %98
    %vm100 = vcmp.lt.s32.totalorder %v39, 127
    %v101 = vsel %vm100, %v97, %v99
    %v102 = vsel %vm100, %v99, %v97
    %s103 = scalar_lea.vmem [#allocation2], 80
    %v104 = vld [vmem:[%s103] sm:$0xff]
    %v105 = vld [vmem:[%s103 + $0x8] sm:$0xff]
    %v106 = vmul.f32 %v101, %v104
    %v107 = vmul.f32 %v102, %v105
    %v108 = vadd.f32 %v94, %v106
    %v109 = vadd.f32 %v95, %v107
    %110 = vrot.lane.b32.xlu0 %v32, 113
    %v111 = vpop.permute.xlu0 %110
    %112 = vrot.lane.b32.xlu0 %v33, 113
    %v113 = vpop.permute.xlu0 %112
    %vm114 = vcmp.lt.s32.totalorder %v39, 113
    %v115 = vsel %vm114, %v111, %v113
    %v116 = vsel %vm114, %v113, %v111
    %s117 = scalar_lea.vmem [#allocation2], 96
    %v118 = vld [vmem:[%s117] sm:$0xff]
    %v119 = vld [vmem:[%s117 + $0x8] sm:$0xff]
    %v120 = vmul.f32 %v115, %v118
    %v121 = vmul.f32 %v116, %v119
    %v122 = vadd.f32 %v108, %v120
    %v123 = vadd.f32 %v109, %v121
    %124 = vrot.lane.b32.xlu0 %v32, 112
    %v125 = vpop.permute.xlu0 %124
    %126 = vrot.lane.b32.xlu0 %v33, 112
    %v127 = vpop.permute.xlu0 %126
    %vm128 = vcmp.lt.s32.totalorder %v39, 112
    %v129 = vsel %vm128, %v125, %v127
    %v130 = vsel %vm128, %v127, %v125
    %s131 = scalar_lea.vmem [#allocation2], 112
    %v132 = vld [vmem:[%s131] sm:$0xff]
    %v133 = vld [vmem:[%s131 + $0x8] sm:$0xff]
    %v134 = vmul.f32 %v129, %v132
    %v135 = vmul.f32 %v130, %v133
    %v136 = vadd.f32 %v122, %v134
    %v137 = vadd.f32 %v123, %v135
    %138 = vrot.lane.b32.xlu0 %v32, 111
    %v139 = vpop.permute.xlu0 %138
    %140 = vrot.lane.b32.xlu0 %v33, 111
    %v141 = vpop.permute.xlu0 %140
    %vm142 = vcmp.lt.s32.totalorder %v39, 111
    %v143 = vsel %vm142, %v139, %v141
    %v144 = vsel %vm142, %v141, %v139
    %s145 = scalar_lea.vmem [#allocation2], 128
    %v146 = vld [vmem:[%s145] sm:$0xff]
    %v147 = vld [vmem:[%s145 + $0x8] sm:$0xff]
    %v148 = vmul.f32 %v143, %v146
    %v149 = vmul.f32 %v144, %v147
    %v150 = vadd.f32 %v136, %v148
    %v151 = vadd.f32 %v137, %v149
    %v152 = vld [vmem:[%s2] sm:$0xff]
    %v153 = vld [vmem:[%s2 + $0x8] sm:$0xff]
    %v154 = vld [vmem:[%s2 + $0x10] sm:$0xff]
    %156 = vset.pattern.permute.xlu0 0
    %157 = vperm.xlu0 %156, %v152
    %v158 = vpop.permute.xlu0 %157
    %v160 = vadd.f32 %v150, %v158
    %v161 = vadd.f32 %v151, %v158
    %v162 = vmax.f32 %v160, 0.0
    %v163 = vmax.f32 %v161, 0.0
    %v164 = vld [vmem:[%s3] sm:$0xff]
    %v165 = vld [vmem:[%s3 + $0x8] sm:$0xff]
    %167 = vset.pattern.permute.xlu0 0
    %168 = vperm.xlu0 %167, %v153
    %v169 = vpop.permute.xlu0 %168
    %172 = vset.pattern.permute.xlu0 0
    %173 = vperm.xlu0 %172, %v154
    %v174 = vpop.permute.xlu0 %173
    %vm176 = vcmask 64512
    %v178 = vsel %vm176, %v164, 0
    %v181 = vsel %vm176, %v165, 0
    %183 = vmatprep.subr.mxu0 %v163
    %184 = vmatpush1.msra.mxu0 %v162
    %185 = vmatprep.subr.mxu0 0.0
    %186 = vmatpush1.msra.mxu0 0.0
    %187 = vmatprep.subr.mxu0 0.0
    %188 = vmatpush1.msra.mxu0 0.0
    %189 = vmatprep.subr.mxu0 0.0
    %190 = vmatpush1.msra.mxu0 0.0
    %191 = vmatprep.subr.mxu0 0.0
    %192 = vmatpush1.msra.mxu0 0.0
    %193 = vmatprep.subr.mxu0 0.0
    %194 = vmatpush1.msra.mxu0 0.0
    %195 = vmatprep.subr.mxu0 0.0
    %196 = vmatpush1.msra.mxu0 0.0
    %197 = vmatprep.subr.mxu0 0.0
    %198 = vmatpush1.msra.mxu0 0.0
    %199 = vmatprep.subr.mxu0 0.0
    %200 = vmatpush1.msra.mxu0 0.0
    %201 = vmatprep.subr.mxu0 0.0
    %202 = vmatpush1.msra.mxu0 0.0
    %203 = vmatprep.subr.mxu0 0.0
    %204 = vmatpush1.msra.mxu0 0.0
    %205 = vmatprep.subr.mxu0 0.0
    %206 = vmatpush1.msra.mxu0 0.0
    %207 = vmatprep.subr.mxu0 0.0
    %208 = vmatpush1.msra.mxu0 0.0
    %209 = vmatprep.subr.mxu0 0.0
    %210 = vmatpush1.msra.mxu0 0.0
    %211 = vmatprep.subr.mxu0 0.0
    %212 = vmatpush1.msra.mxu0 0.0
    %213 = vmatprep.subr.mxu0 0.0
    %214 = vmatpush1.msra.mxu0 0.0
    %215 = vmatprep.subr.mxu0 0.0
    %216 = vmatpush1.msra.mxu0 0.0
    %217 = vmatprep.subr.mxu0 0.0
    %218 = vmatpush1.msra.mxu0 0.0
    %219 = vmatprep.subr.mxu0 0.0
    %220 = vmatpush1.msra.mxu0 0.0
    %221 = vmatprep.subr.mxu0 0.0
    %222 = vmatpush1.msra.mxu0 0.0
    %223 = vmatprep.subr.mxu0 0.0
    %224 = vmatpush1.msra.mxu0 0.0
    %225 = vmatprep.subr.mxu0 0.0
    %226 = vmatpush1.msra.mxu0 0.0
    %227 = vmatprep.subr.mxu0 0.0
    %228 = vmatpush1.msra.mxu0 0.0
    %229 = vmatprep.subr.mxu0 0.0
    %230 = vmatpush1.msra.mxu0 0.0
    %231 = vmatprep.subr.mxu0 0.0
    %232 = vmatpush1.msra.mxu0 0.0
    %233 = vmatprep.subr.mxu0 0.0
    %234 = vmatpush1.msra.mxu0 0.0
    %235 = vmatprep.subr.mxu0 0.0
    %236 = vmatpush1.msra.mxu0 0.0
    %237 = vmatprep.subr.mxu0 0.0
    %238 = vmatpush1.msra.mxu0 0.0
    %239 = vmatprep.subr.mxu0 0.0
    %240 = vmatpush1.msra.mxu0 0.0
    %241 = vmatprep.subr.mxu0 0.0
    %242 = vmatpush1.msra.mxu0 0.0
    %243 = vmatprep.subr.mxu0 0.0
    %244 = vmatpush1.msra.mxu0 0.0
    %245 = vmatprep.subr.mxu0 0.0
    %246 = vmatpush1.msra.mxu0 0.0
    %247 = vmatprep.mubr.f32.mxu0 0.0
    %248 = vmatmul.mubr.f32.gmra.mrb[0].mxu0 %v178
    %v249 = vpop.f32.mrb[0].mxu0
    %v250 = vadd.f32 %v169, %v249
    %v251 = vpop.f32.mrb[0].mxu0
    %v252 = vadd.f32 %v169, %v251
    %253 = vmatprep.mubr.f32.mxu0 0.0
    %254 = vmatmul.mubr.f32.gmra.mrb[0].mxu0 %v181
    %v255 = vpop.f32.mrb[0].mxu0
    %v256 = vadd.f32 %v174, %v255
    %v257 = vpop.f32.mrb[0].mxu0
    %v258 = vadd.f32 %v174, %v257
    %259 = vdwg.mxu0
    %v260 = vmax.f32 %v250, 0.0
    %v261 = vmax.f32 %v252, 0.0
    %v262 = vmax.f32 %v256, 0.0
    %v263 = vmax.f32 %v258, 0.0
    %264 = vst [vmem:[#allocation5] sm:$0xff] %v260
    %265 = vst [vmem:[#allocation5 + $0x8] sm:$0xff] %v261
    %266 = vst [vmem:[#allocation5 + $0x10] sm:$0xff] %v262
    %267 = vst [vmem:[#allocation5 + $0x18] sm:$0xff] %v263
    // Predicated region
    $region22: #{tpu_custom_call.1} parent=1 // pred_check
      _
    $region23: #{tpu_custom_call.1} parent=1 // pred_check_branch
      %269 = sbr.rel (0) target = $region25
    $region24: #{tpu_custom_call.1} parent=1 // pred_region
      %s271 = ssub.s32 512, 512
      %272 = vsyncadd [#allocation4], %s271
      %s273 = sshll.u32 [#allocation5], 4
      %s274 = int_to_ptr.vmem [resolvable:$true] %s273
      %279 = dma.vmem_to_hbm [thread:$0]  %s274, 512, %s4, [#allocation4], 256, 256, 16
    $region25: #{tpu_custom_call.1} parent=1 // pred_fallthru
      _
    // Predicated region
    $region26: #{tpu_custom_call.1} parent=1 // pred_check
      _
    $region27: #{tpu_custom_call.1} parent=1 // pred_check_branch
      %281 = sbr.rel (0) target = $region29
    $region28: #{tpu_custom_call.1} parent=1 // pred_region
      %282 = dma.done [#allocation4], 512
    $region29: #{tpu_custom_call.1} parent=1 // pred_fallthru
      _
    %283 = vsyncpa [#allocation3], 1
    %284 = vsyncpa [#allocation4], 1

</llo_original>
